<compile_context>
chip_gen: v5e
topology: v5e:2x2
jax: 0.10.0
libtpu: 0.0.40
codegen_flags: <defaults>
</compile_context>

<pallas_src>
import math

import jax
import jax.numpy as jnp
from jax import lax
from jax.experimental import pallas as pl
from jax.experimental.pallas import tpu as pltpu


_SQRT_HALF = 1.0 / math.sqrt(2.0)


def _round_up(n, m):
    return ((n + m - 1) // m) * m


# ---------------------------------------------------------------------------
# Hardware query / feature probe (cached; never wrap the real kernel call).
# ---------------------------------------------------------------------------

_VMEM_CAP = None


def _tpu_vmem_capacity_bytes():
    """Physical VMEM per core; fall back to 64 MiB (v7x, tightest budget)."""
    global _VMEM_CAP
    if _VMEM_CAP is None:
        cap = None
        try:  # hardware query only -- not the kernel call
            cap = getattr(pltpu.get_tpu_info(), "vmem_capacity_bytes", None)
        except Exception:
            cap = None
        _VMEM_CAP = int(cap) if cap else 64 * 1024 * 1024
    return _VMEM_CAP


def _invariant_spec(shape, single_buffer):
    """BlockSpec for grid-invariant operands (weights/biases): constant block
    index; single-buffered when pl.Buffered(1) is supported."""
    if single_buffer:
        return pl.BlockSpec(shape, lambda *_: (0,) * len(shape),
                            pipeline_mode=pl.Buffered(1))
    return pl.BlockSpec(shape, lambda *_: (0,) * len(shape))


_BUFFERED1_OK = None


def _single_buffer_supported():
    """Probe once (on a tiny kernel) whether pipeline_mode=pl.Buffered(1)
    lowers on this JAX/libtpu.  Confining the try/except to the probe keeps
    real lowering/VMEM errors from being swallowed."""
    global _BUFFERED1_OK
    if _BUFFERED1_OK is not None:
        return _BUFFERED1_OK
    if not hasattr(pl, "Buffered"):
        _BUFFERED1_OK = False
        return False

    def _probe(a_ref, o_ref):
        o_ref[...] = a_ref[...] + 1.0

    try:
        out = pl.pallas_call(
            _probe,
            out_shape=jax.ShapeDtypeStruct((8, 128), jnp.float32),
            grid=(2,),
            in_specs=[_invariant_spec((8, 128), True)],
            out_specs=pl.BlockSpec((8, 128), lambda i: (0, 0)),
        )(jnp.zeros((8, 128), jnp.float32))
        jax.block_until_ready(out)
        _BUFFERED1_OK = True
    except Exception:  # feature probe only
        _BUFFERED1_OK = False
    return _BUFFERED1_OK


# ---------------------------------------------------------------------------
# Kernel
# ---------------------------------------------------------------------------

def _make_ffn_kernel(n_chunks, fc, exact_f32):
    """Per row-tile FFN body.  Weights stay VMEM-resident; the F dimension is
    processed in chunks of `fc`, accumulating the second matmul into a
    (tm, H) f32 scratch."""
    prec = lax.Precision.HIGHEST if exact_f32 else None

    def kernel(x_ref, w1_ref, b1_ref, w2_ref, b2_ref, o_ref, acc_ref):
        x = x_ref[...]
        acc_ref[...] = jnp.zeros_like(acc_ref)   # re-init every step (megacore-safe)

        def chunk(k, carry):
            off = k * fc
            if not isinstance(off, int):
                off = pl.multiple_of(off, fc)    # aligned dynamic lane offset
            # layer 1 chunk: [tm, H] @ [H, fc] -> f32 accumulation on the MXU
            h = jnp.dot(x, w1_ref[:, pl.ds(off, fc)],
                        preferred_element_type=jnp.float32, precision=prec)
            h = h + b1_ref[:, pl.ds(off, fc)].astype(jnp.float32)
            if exact_f32:
                # exact GELU (torch.nn.GELU default): 0.5*x*(1 + erf(x/sqrt(2)))
                g = 0.5 * h * (1.0 + lax.erf(h * _SQRT_HALF))
            else:
                # bf16 tanh-GELU: elementwise work in bf16 (VPU) / tanh on EUP,
                # already in the MXU input dtype for the second matmul.
                g = jax.nn.gelu(h.astype(w2_ref.dtype), approximate=True)
                g = g.astype(w2_ref.dtype)
            # layer 2 chunk: [tm, fc] @ [fc, H], accumulated in f32
            acc_ref[...] += jnp.dot(g, w2_ref[pl.ds(off, fc), :],
                                    preferred_element_type=jnp.float32,
                                    precision=prec)
            return carry

        if n_chunks == 1:
            chunk(0, 0)
        else:
            lax.fori_loop(0, n_chunks, chunk, 0, unroll=(n_chunks <= 8))

        o_ref[...] = (acc_ref[...] + b2_ref[...].astype(jnp.float32)
                      ).astype(o_ref.dtype)

    return kernel


# ---------------------------------------------------------------------------
# Tiling / VMEM heuristics
# ---------------------------------------------------------------------------

def _pick_tm(M, vmem_cap):
    """Row tile.  64-MiB parts (v7x, 2 TCs) keep tm<=512 and >=8 grid steps so
    both cores' pipelines stay full; 128-MiB parts (v5e/v6e) take tm up to
    1024 now that intermediates no longer scale with F.  Small/ragged M runs
    one full-extent tile padded only to the 16-row bf16 sublane granule."""
    big_vmem = vmem_cap >= 96 * 1024 * 1024
    cands = (1024, 512, 256, 128) if big_vmem else (512, 256, 128)
    min_steps = 4 if big_vmem else 8
    for c in cands:
        if M >= min_steps * c:
            return c
    if M >= 256:
        return 128
    return _round_up(max(M, 1), 16)


def _pick_fc(F, fc_max=512):
    """FFN-dim chunk: largest lane-aligned size dividing F (else full F)."""
    for c in (1024, 512, 256, 128):
        if c <= fc_max and F % c == 0:
            return c
    return F


def _vmem_limit_bytes(tm, H, F, fc, w_item, io_item, vmem_cap):
    """Raise the scoped-VMEM limit only when the working set exceeds the
    smallest scoped default across generations (v5e: 16 MiB), capped at 85%
    of physical VMEM to leave compiler-scratch headroom (esp. v7x)."""
    weights = 2 * 2 * H * F * w_item          # W1+W2; conservatively x2 buffers
    biases = 2 * 2 * (H + F) * 4
    io = 2 * 2 * tm * H * io_item             # x & out tiles, double-buffered
    acc = tm * H * 4
    inter = 3 * tm * fc * 4                   # per-chunk h/g intermediates (f32)
    est = weights + biases + io + acc + inter
    if est <= 12 * 1024 * 1024:               # fits v5e's 16 MiB scoped default
        return None
    cap = (vmem_cap * 85) // 100
    return int(min(max(est * 5 // 4, 16 * 1024 * 1024), cap))


# ---------------------------------------------------------------------------
# pallas_call wrappers
# ---------------------------------------------------------------------------

def _call_ffn(x2d, w1, b1, w2, b2, *, tm, fc, out_dtype, exact_f32):
    M_pad, H = x2d.shape
    F = w1.shape[1]
    assert F % fc == 0
    n_chunks = F // fc

    vmem_cap = _tpu_vmem_capacity_bytes()
    io_item = max(x2d.dtype.itemsize, jnp.dtype(out_dtype).itemsize)
    vmem_limit = _vmem_limit_bytes(tm, H, F, fc, w1.dtype.itemsize, io_item,
                                   vmem_cap)
    single_buf = _single_buffer_supported()

    cost = pl.CostEstimate(
        flops=4 * M_pad * H * F,
        transcendentals=M_pad * F,
        bytes_accessed=(M_pad * H * (x2d.dtype.itemsize
                                     + jnp.dtype(out_dtype).itemsize)
                        + 2 * H * F * w1.dtype.itemsize + (H + F) * 4),
    )

    return pl.pallas_call(
        _make_ffn_kernel(n_chunks, fc, exact_f32),
        out_shape=jax.ShapeDtypeStruct((M_pad, H), out_dtype),
        grid_spec=pltpu.PrefetchScalarGridSpec(
            num_scalar_prefetch=0,
            grid=(M_pad // tm,),
            in_specs=[
                pl.BlockSpec((tm, H), lambda i: (i, 0)),       # x row-tile
                _invariant_spec((H, F), single_buf),           # W1 (resident)
                _invariant_spec((1, F), single_buf),           # b1
                _invariant_spec((F, H), single_buf),           # W2 (resident)
                _invariant_spec((1, H), single_buf),           # b2
            ],
            out_specs=pl.BlockSpec((tm, H), lambda i: (i, 0)),
            scratch_shapes=[pltpu.VMEM((tm, H), jnp.float32)],  # f32 accumulator
        ),
        compiler_params=pltpu.CompilerParams(
            dimension_semantics=("parallel",),
            vmem_limit_bytes=vmem_limit,
        ),
        cost_estimate=cost,
    )(x2d, w1, b1, w2, b2)


def ffn_pallas(x2d, w1, b1, w2, b2, *, out_dtype=None, tm=None, fc_max=512,
               exact_f32=False):
    """x2d: [M, H]; w1: [H, F]; b1: [1, F] f32; w2: [F, H]; b2: [1, H] f32."""
    M, H = x2d.shape
    F = w1.shape[1]
    out_dtype = out_dtype or x2d.dtype
    tm = tm or _pick_tm(M, _tpu_vmem_capacity_bytes())
    fc = _pick_fc(F, fc_max)
    M_pad = _round_up(max(M, 1), tm)
    if M_pad != M:
        x2d = jnp.pad(x2d, ((0, M_pad - M), (0, 0)))
    out = _call_ffn(x2d, w1, b1, w2, b2, tm=tm, fc=fc,
                    out_dtype=out_dtype, exact_f32=exact_f32)
    return out[:M] if M_pad != M else out


def feed_forward_network(x, w1, b1, w2, b2, *, compute_dtype=jnp.bfloat16,
                         tm=None, fc_max=512):
    """x: [..., hidden] -> [..., hidden]; Linear -> GELU -> Linear.

    compute_dtype=bf16 (default): MXU matmuls in bf16 with f32 accumulation,
    tanh-GELU in bf16.  compute_dtype=f32: exact erf GELU and
    Precision.HIGHEST matmuls for strict parity with the f32 PyTorch module.
    The output keeps x.dtype.
    """
    orig_shape, orig_dtype = x.shape, x.dtype
    H = orig_shape[-1]
    exact_f32 = jnp.dtype(compute_dtype) == jnp.dtype(jnp.float32)

    out = ffn_pallas(
        x.reshape(-1, H).astype(compute_dtype),
        w1.astype(compute_dtype), b1.reshape(1, -1).astype(jnp.float32),
        w2.astype(compute_dtype), b2.reshape(1, -1).astype(jnp.float32),
        out_dtype=orig_dtype, tm=tm, fc_max=fc_max, exact_f32=exact_f32)
    return out.reshape(orig_shape)


def _reference_ffn(x, w1, b1, w2, b2, precision=None):
    h = jnp.dot(x, w1, precision=precision) + b1.reshape(-1)
    g = 0.5 * h * (1.0 + lax.erf(h / jnp.sqrt(2.0)))
    return jnp.dot(g, w2, precision=precision) + b2.reshape(-1)


if __name__ == "__main__":
    HI = lax.Precision.HIGHEST

    # ---- Test 1: small shapes consistent with the module -------------------
    batch, seq, hidden, ffn = 2, 8, 32, 64
    key = jax.random.PRNGKey(0)
    kx, kw1, kb1, kw2, kb2 = jax.random.split(key, 5)

    x = jax.random.normal(kx, (batch, seq, hidden), dtype=jnp.float32)
    bound1 = 1.0 / math.sqrt(hidden)
    w1 = jax.random.uniform(kw1, (hidden, ffn), minval=-bound1, maxval=bound1,
                            dtype=jnp.float32)
    b1 = jax.random.uniform(kb1, (ffn,), minval=-bound1, maxval=bound1,
                            dtype=jnp.float32)
    bound2 = 1.0 / math.sqrt(ffn)
    w2 = jax.random.uniform(kw2, (ffn, hidden), minval=-bound2, maxval=bound2,
                            dtype=jnp.float32)
    b2 = jax.random.uniform(kb2, (hidden,), minval=-bound2, maxval=bound2,
                            dtype=jnp.float32)

    ref = _reference_ffn(x, w1, b1, w2, b2, precision=HI)

    # Exact f32 compute path (HIGHEST-precision MXU, erf GELU).
    out_f32 = jax.block_until_ready(
        feed_forward_network(x, w1, b1, w2, b2, compute_dtype=jnp.float32))
    assert out_f32.shape == (batch, seq, hidden)
    err = float(jnp.max(jnp.abs(out_f32 - ref)))
    assert jnp.allclose(out_f32, ref, atol=1e-5, rtol=1e-5), f"f32 err={err}"

    # Default bf16 MXU path (f32 accumulation, tanh GELU) -> looser tolerance.
    out_bf16 = jax.block_until_ready(feed_forward_network(x, w1, b1, w2, b2))
    assert out_bf16.shape == (batch, seq, hidden)
    err = float(jnp.max(jnp.abs(out_bf16 - ref)))
    assert jnp.allclose(out_bf16, ref, atol=5e-2, rtol=5e-2), f"bf16 err={err}"

    # ---- Test 2: ragged M (padding path) + F chunked into 2 pieces ---------
    B2, S2, H2, F2 = 3, 50, 128, 1024     # M = 150 -> single 160-row tile
    k2 = jax.random.PRNGKey(1)
    k2x, k2w1, k2b1, k2w2, k2b2 = jax.random.split(k2, 5)
    x_b = jax.random.normal(k2x, (B2, S2, H2), dtype=jnp.float32)
    bo1 = 1.0 / math.sqrt(H2)
    w1_b = jax.random.uniform(k2w1, (H2, F2), minval=-bo1, maxval=bo1,
                              dtype=jnp.float32)
    b1_b = jax.random.uniform(k2b1, (F2,), minval=-bo1, maxval=bo1,
                              dtype=jnp.float32)
    bo2 = 1.0 / math.sqrt(F2)
    w2_b = jax.random.uniform(k2w2, (F2, H2), minval=-bo2, maxval=bo2,
                              dtype=jnp.float32)
    b2_b = jax.random.uniform(k2b2, (H2,), minval=-bo2, maxval=bo2,
                              dtype=jnp.float32)

    ref_b = _reference_ffn(x_b, w1_b, b1_b, w2_b, b2_b, precision=HI)

    out_b = jax.block_until_ready(
        feed_forward_network(x_b, w1_b, b1_b, w2_b, b2_b))
    assert out_b.shape == (B2, S2, H2)
    err = float(jnp.max(jnp.abs(out_b - ref_b)))
    assert jnp.allclose(out_b, ref_b, atol=5e-2, rtol=5e-2), f"bf16 err={err}"

    out_b32 = jax.block_until_ready(
        feed_forward_network(x_b, w1_b, b1_b, w2_b, b2_b,
                             compute_dtype=jnp.float32))
    err = float(jnp.max(jnp.abs(out_b32 - ref_b)))
    assert jnp.allclose(out_b32, ref_b, atol=1e-4, rtol=1e-4), f"f32 err={err}"

    print("KERNEL_OK")
</pallas_src>

<mosaic_0001>
module attributes {stable_mosaic.version = 11 : i64} {
  func.func @_probe(%arg0: i32, %arg1: memref<8x128xf32, #tpu.memory_space<vmem>>, %arg2: memref<8x128xf32, #tpu.memory_space<vmem>>) attributes {dimension_semantics = [#tpu.dimension_semantics<arbitrary>], iteration_bounds = array<i64: 2>, scalar_prefetch = 0 : i64, scratch_operands = 0 : i64, tpu.core_type = #tpu.core_type<tc>, window_params = [{pipeline_mode = #tpu.pipeline_mode<synchronous>, transform_indices = @transform_0, window_bounds = array<i64: 8, 128>}, {pipeline_mode = #tpu.pipeline_mode<synchronous>, transform_indices = @transform_1, window_bounds = array<i64: 8, 128>}]} {
    %c0 = arith.constant 0 : index
    %c0_0 = arith.constant 0 : index
    %0 = vector.load %arg1[%c0, %c0_0] : memref<8x128xf32, #tpu.memory_space<vmem>>, vector<8x128xf32>
    %cst = arith.constant 1.000000e+00 : f32
    %1 = vector.broadcast %cst : f32 to vector<8x128xf32>
    %2 = arith.addf %0, %1 : vector<8x128xf32>
    %c0_1 = arith.constant 0 : index
    %c0_2 = arith.constant 0 : index
    %3 = vector.load %arg2[%c0_1, %c0_2] : memref<8x128xf32, #tpu.memory_space<vmem>>, vector<8x128xf32>
    tpu.vector_store %arg2[%c0_1, %c0_2], %2 {strides = array<i32>} : memref<8x128xf32, #tpu.memory_space<vmem>>, vector<8x128xf32>,
    return
  }
  func.func @transform_0(%arg0: i32) -> (i32, i32) {
    %c0_i32 = arith.constant 0 : i32
    %c0_i32_0 = arith.constant 0 : i32
    %c0_i32_1 = arith.constant 0 : i32
    return %c0_i32, %c0_i32_0 : i32, i32
  }
  func.func @transform_1(%arg0: i32) -> (i32, i32) {
    %c0_i32 = arith.constant 0 : i32
    %c0_i32_0 = arith.constant 0 : i32
    %c0_i32_1 = arith.constant 0 : i32
    return %c0_i32, %c0_i32_0 : i32, i32
  }
}

module attributes {stable_mosaic.version = 11 : i64} {
  func.func @kernel(%arg0: i32, %arg1: memref<16x32xf32, #tpu.memory_space<vmem>>, %arg2: memref<32x64xf32, #tpu.memory_space<vmem>>, %arg3: memref<1x64xf32, #tpu.memory_space<vmem>>, %arg4: memref<64x32xf32, #tpu.memory_space<vmem>>, %arg5: memref<1x32xf32, #tpu.memory_space<vmem>>, %arg6: memref<16x32xf32, #tpu.memory_space<vmem>>, %arg7: memref<16x32xf32, #tpu.memory_space<vmem>>) attributes {dimension_semantics = [#tpu.dimension_semantics<parallel>], iteration_bounds = array<i64: 1>, scalar_prefetch = 0 : i64, scratch_operands = 1 : i64, tpu.core_type = #tpu.core_type<tc>, window_params = [{transform_indices = @transform_0, window_bounds = array<i64: 16, 32>}, {pipeline_mode = #tpu.pipeline_mode<synchronous>, transform_indices = @transform_1, window_bounds = array<i64: 32, 64>}, {pipeline_mode = #tpu.pipeline_mode<synchronous>, transform_indices = @transform_2, window_bounds = array<i64: 1, 64>}, {pipeline_mode = #tpu.pipeline_mode<synchronous>, transform_indices = @transform_3, window_bounds = array<i64: 64, 32>}, {pipeline_mode = #tpu.pipeline_mode<synchronous>, transform_indices = @transform_4, window_bounds = array<i64: 1, 32>}, {transform_indices = @transform_5, window_bounds = array<i64: 16, 32>}]} {
    %c0 = arith.constant 0 : index
    %c0_0 = arith.constant 0 : index
    %0 = vector.load %arg1[%c0, %c0_0] : memref<16x32xf32, #tpu.memory_space<vmem>>, vector<16x32xf32>
    %cst = arith.constant 0.000000e+00 : f32
    %1 = vector.broadcast %cst : f32 to vector<16x32xf32>
    %c0_1 = arith.constant 0 : index
    %c0_2 = arith.constant 0 : index
    %2 = vector.load %arg7[%c0_1, %c0_2] : memref<16x32xf32, #tpu.memory_space<vmem>>, vector<16x32xf32>
    tpu.vector_store %arg7[%c0_1, %c0_2], %1 {strides = array<i32>} : memref<16x32xf32, #tpu.memory_space<vmem>>, vector<16x32xf32>,
    %c0_3 = arith.constant 0 : index
    %c0_4 = arith.constant 0 : index
    %3 = vector.load %arg2[%c0_3, %c0_4] : memref<32x64xf32, #tpu.memory_space<vmem>>, vector<32x64xf32>
    %cst_5 = arith.constant dense<0.000000e+00> : vector<16x64xf32>
    %4 = tpu.matmul %0, %3, %cst_5 {dimension_numbers = #tpu.dot_dimension_numbers<[1], [0], [0], [1], [0, 0, 1, 1], [], []>, precision = #tpu.contract_precision<fp32>} : vector<16x32xf32>, vector<32x64xf32>, vector<16x64xf32> -> vector<16x64xf32>
    %c0_6 = arith.constant 0 : index
    %c0_7 = arith.constant 0 : index
    %5 = vector.load %arg3[%c0_6, %c0_7] : memref<1x64xf32, #tpu.memory_space<vmem>>, vector<1x64xf32>
    %6 = vector.broadcast %5 : vector<1x64xf32> to vector<16x64xf32>
    %7 = arith.addf %4, %6 : vector<16x64xf32>
    %cst_8 = arith.constant 5.000000e-01 : f32
    %8 = vector.broadcast %cst_8 : f32 to vector<16x64xf32>
    %9 = arith.mulf %8, %7 : vector<16x64xf32>
    %cst_9 = arith.constant 0.707106769 : f32
    %10 = vector.broadcast %cst_9 : f32 to vector<16x64xf32>
    %11 = arith.mulf %7, %10 : vector<16x64xf32>
    %12 = math.erf %11 : vector<16x64xf32>
    %cst_10 = arith.constant 1.000000e+00 : f32
    %13 = vector.broadcast %cst_10 : f32 to vector<16x64xf32>
    %14 = arith.addf %13, %12 : vector<16x64xf32>
    %15 = arith.mulf %9, %14 : vector<16x64xf32>
    %c0_11 = arith.constant 0 : index
    %c0_12 = arith.constant 0 : index
    %16 = vector.load %arg7[%c0_11, %c0_12] : memref<16x32xf32, #tpu.memory_space<vmem>>, vector<16x32xf32>
    %c0_13 = arith.constant 0 : index
    %c0_14 = arith.constant 0 : index
    %17 = vector.load %arg4[%c0_13, %c0_14] : memref<64x32xf32, #tpu.memory_space<vmem>>, vector<64x32xf32>
    %cst_15 = arith.constant dense<0.000000e+00> : vector<16x32xf32>
    %18 = tpu.matmul %15, %17, %cst_15 {dimension_numbers = #tpu.dot_dimension_numbers<[1], [0], [0], [1], [0, 0, 1, 1], [], []>, precision = #tpu.contract_precision<fp32>} : vector<16x64xf32>, vector<64x32xf32>, vector<16x32xf32> -> vector<16x32xf32>
    %19 = arith.addf %16, %18 : vector<16x32xf32>
    %c0_16 = arith.constant 0 : index
    %c0_17 = arith.constant 0 : index
    %20 = vector.load %arg7[%c0_16, %c0_17] : memref<16x32xf32, #tpu.memory_space<vmem>>, vector<16x32xf32>
    tpu.vector_store %arg7[%c0_16, %c0_17], %19 {strides = array<i32>} : memref<16x32xf32, #tpu.memory_space<vmem>>, vector<16x32xf32>,
    %c0_18 = arith.constant 0 : index
    %c0_19 = arith.constant 0 : index
    %21 = vector.load %arg7[%c0_18, %c0_19] : memref<16x32xf32, #tpu.memory_space<vmem>>, vector<16x32xf32>
    %c0_20 = arith.constant 0 : index
    %c0_21 = arith.constant 0 : index
    %22 = vector.load %arg5[%c0_20, %c0_21] : memref<1x32xf32, #tpu.memory_space<vmem>>, vector<1x32xf32>
    %23 = vector.broadcast %22 : vector<1x32xf32> to vector<16x32xf32>
    %24 = arith.addf %21, %23 : vector<16x32xf32>
    %c0_22 = arith.constant 0 : index
    %c0_23 = arith.constant 0 : index
    %25 = vector.load %arg6[%c0_22, %c0_23] : memref<16x32xf32, #tpu.memory_space<vmem>>, vector<16x32xf32>
    tpu.vector_store %arg6[%c0_22, %c0_23], %24 {strides = array<i32>} : memref<16x32xf32, #tpu.memory_space<vmem>>, vector<16x32xf32>,
    return
  }
  func.func @transform_0(%arg0: i32) -> (i32, i32) {
    %c0_i32 = arith.constant 0 : i32
    %c0_i32_0 = arith.constant 0 : i32
    return %arg0, %c0_i32 : i32, i32
  }
  func.func @transform_1(%arg0: i32) -> (i32, i32) {
    %c0_i32 = arith.constant 0 : i32
    %c0_i32_0 = arith.constant 0 : i32
    %c0_i32_1 = arith.constant 0 : i32
    return %c0_i32, %c0_i32_0 : i32, i32
  }
  func.func @transform_2(%arg0: i32) -> (i32, i32) {
    %c0_i32 = arith.constant 0 : i32
    %c0_i32_0 = arith.constant 0 : i32
    %c0_i32_1 = arith.constant 0 : i32
    return %c0_i32, %c0_i32_0 : i32, i32
  }
  func.func @transform_3(%arg0: i32) -> (i32, i32) {
    %c0_i32 = arith.constant 0 : i32
    %c0_i32_0 = arith.constant 0 : i32
    %c0_i32_1 = arith.constant 0 : i32
    return %c0_i32, %c0_i32_0 : i32, i32
  }
  func.func @transform_4(%arg0: i32) -> (i32, i32) {
    %c0_i32 = arith.constant 0 : i32
    %c0_i32_0 = arith.constant 0 : i32
    %c0_i32_1 = arith.constant 0 : i32
    return %c0_i32, %c0_i32_0 : i32, i32
  }
  func.func @transform_5(%arg0: i32) -> (i32, i32) {
    %c0_i32 = arith.constant 0 : i32
    %c0_i32_0 = arith.constant 0 : i32
    return %arg0, %c0_i32 : i32, i32
  }
}

</mosaic_0001>

<llo_original>
// kernel: tpu_custom_call.1
$region0: #{tpu_custom_call.1}
  #allocation0 [shape = 'u32[]', space=smem, size = 0x4, offset = 0x4, fixed_abs, tag = 'smem constant byte address 0x4 - core index']
  #allocation1 [shape = 'u32[72,128]{1,0:T(1,128)}', space=vmem, size = 0x9000, scoped, tag = 'internal scratch']
  %s0 = inlined_call_operand.hbm [shape: f32[8,128], index: 0, kind: input, shape index: {}]
  %s1 = inlined_call_operand.hbm [shape: f32[8,128], index: 1, kind: output, shape index: {}]
  %s2 = sld [smem:[#allocation0]]
  $region41: #{tpu_custom_call.1} parent=0
    _
  %s4 = ssub.s32 1, %s2
  %s5 = scalar_select 0, %s4, %s2
  $region1: #{tpu_custom_call.1} parent=0
    #allocation2 [shape = 'u8[4096]{0}', space=vmem, size = 0x1000, scoped, tag = 'input window, operand 0, single buffered']
    #allocation3 [shape = 's32[2]{0}', space=sflag, size = 0x8, scoped, tag = 'scoped memory for tpu_custom_call.1']
    #allocation4 [shape = 's32[2]{0}', space=sflag, size = 0x8, scoped, tag = 'scoped memory for tpu_custom_call.1']
    #allocation5 [shape = 'u8[4096]{0}', space=vmem, size = 0x1000, scoped, tag = 'output window, operand 0, single buffered']
    %6 = vsyncpa [#allocation3], 0
    %7 = vsyncpa [#allocation4], 0
    loop: start=0, step=1, limit=4
    $region2: #{tpu_custom_call.1} parent=1 // loop_pre_header
      _
    $region3: #{tpu_custom_call.1} parent=1 // loop_header
      %s9 = sphi 0, %s13
      %p10 = scmp.ge.s32.totalorder %s9, 4
      %s17 = sphi 0, %s17
      %s19 = sphi 0, %s17
      %s20 = sphi 0, %s19
      %s34 = sphi 0, %s20
      %s38 = sphi 0, %s38
      %s40 = sphi 0, %s38
      %s41 = sphi 0, %s40
      %s55 = sphi 0, %s41
    $region4: #{tpu_custom_call.1} parent=1 // loop_header_branch
      %12 = sbr.rel (%p10) target = $region8
    $region5: #{tpu_custom_call.1} parent=1 // loop_body
      %s14 = ssub.s32 %s9, 1
      %s15 = ssub.s32 %s9, 2
      %s16 = sadd.s32 %s9, 1
      %s18 = sadd.s32 %s17, 1
      %p21 = scmp.eq.s32.totalorder %s9, 1
      %p22 = scmp.ne.s32.totalorder %s17, %s19
      %p23 = scmp.eq.s32.totalorder %s9, 0
      %p24 = por %p22, %p23
      %p25 = scmp.ne.s32.totalorder %s17, %s19
      %p26 = scmp.eq.s32.totalorder %s14, 1
      %p27 = por %p25, %p26
      %p28 = scmp.ne.s32.totalorder %s19, %s20
      %p29 = scmp.eq.s32.totalorder %s14, 0
      %p30 = por %p28, %p29
      %p31 = scmp.ne.s32.totalorder %s19, %s20
      %p32 = scmp.eq.s32.totalorder %s15, 1
      %p33 = por %p31, %p32
      %p35 = scmp.ne.s32.totalorder %s20, %s34
      %p36 = scmp.eq.s32.totalorder %s15, 0
      %p37 = por %p35, %p36
      %s39 = sadd.s32 %s38, 1
      %p42 = scmp.eq.s32.totalorder %s9, 1
      %p43 = scmp.ne.s32.totalorder %s38, %s40
      %p44 = scmp.eq.s32.totalorder %s9, 0
      %p45 = por %p43, %p44
      %p46 = scmp.ne.s32.totalorder %s38, %s40
      %p47 = scmp.eq.s32.totalorder %s14, 1
      %p48 = por %p46, %p47
      %p49 = scmp.ne.s32.totalorder %s40, %s41
      %p50 = scmp.eq.s32.totalorder %s14, 0
      %p51 = por %p49, %p50
      %p52 = scmp.ne.s32.totalorder %s40, %s41
      %p53 = scmp.eq.s32.totalorder %s15, 1
      %p54 = por %p52, %p53
      %p56 = scmp.ne.s32.totalorder %s41, %s55
      %p57 = scmp.eq.s32.totalorder %s15, 0
      %p58 = por %p56, %p57
      %p59 = scmp.le.s32.totalorder 1, %s9
      %p60 = scmp.lt.s32.totalorder %s9, 3
      %p61 = pnand %p59, %p60
      %p62 = pneg %p61
      // Predicated region
      $region9: #{tpu_custom_call.1} parent=5 // pred_check
        _
      $region10: #{tpu_custom_call.1} parent=5 // pred_check_branch
        %64 = sbr.rel (%p61) target = $region12
      $region11: #{tpu_custom_call.1} parent=5 // pred_region
        %s65 = ssub.s32 %s9, 1
        // Predicated region
        $region13: #{tpu_custom_call.1} parent=11 // pred_check
          %p66 = pneg %p30
        $region14: #{tpu_custom_call.1} parent=11 // pred_check_branch
          %68 = sbr.rel (%p66) target = $region16
        $region15: #{tpu_custom_call.1} parent=11 // pred_region
          %70 = vsyncadd [#allocation3], 0
          %s72 = sshll.u32 %s0, 4
          %s73 = int_to_ptr.hbm [resolvable:$true] %s72
          %s74 = sshll.u32 [#allocation2], 4
          %s75 = int_to_ptr.vmem [resolvable:$true] %s74
          %77 = dma.hbm_to_vmem [thread:$0]  %s73, 128, %s75, [#allocation3]
        $region16: #{tpu_custom_call.1} parent=11 // pred_fallthru
          _
      $region12: #{tpu_custom_call.1} parent=5 // pred_fallthru
        _
      %p78 = scmp.lt.s32.totalorder %s9, 2
      // Predicated region
      $region17: #{tpu_custom_call.1} parent=5 // pred_check
        %p79 = pneg %p78
      $region18: #{tpu_custom_call.1} parent=5 // pred_check_branch
        %81 = sbr.rel (%p79) target = $region20
      $region19: #{tpu_custom_call.1} parent=5 // pred_region
        _
      $region20: #{tpu_custom_call.1} parent=5 // pred_fallthru
        _
      %p82 = scmp.le.s32.totalorder 1, %s9
      %p83 = scmp.lt.s32.totalorder %s9, 3
      %p84 = pnand %p82, %p83
      %p85 = pneg %p84
      // Predicated region
      $region21: #{tpu_custom_call.1} parent=5 // pred_check
        _
      $region22: #{tpu_custom_call.1} parent=5 // pred_check_branch
        %87 = sbr.rel (%p84) target = $region24
      $region23: #{tpu_custom_call.1} parent=5 // pred_region
        %s88 = ssub.s32 %s9, 1
        // Predicated region
        $region25: #{tpu_custom_call.1} parent=23 // pred_check
          %p89 = pneg %p30
        $region26: #{tpu_custom_call.1} parent=23 // pred_check_branch
          %91 = sbr.rel (%p89) target = $region28
        $region27: #{tpu_custom_call.1} parent=23 // pred_region
          %93 = dma.done [#allocation3], 128
        $region28: #{tpu_custom_call.1} parent=23 // pred_fallthru
          _
        %p94 = pneg %p30
        %p95 = pneg %p27
        %p96 = pneg %p51
        %p97 = pneg %p48
        %v98 = vld [vmem:[#allocation2] sm:$0xff]
        %v99 = vadd.f32 %v98, 1.0
        %100 = vst [vmem:[#allocation5] sm:$0xff] %v99
        // Predicated region
        $region29: #{tpu_custom_call.1} parent=23 // pred_check
          %p101 = pneg %p48
        $region30: #{tpu_custom_call.1} parent=23 // pred_check_branch
          %103 = sbr.rel (%p101) target = $region32
        $region31: #{tpu_custom_call.1} parent=23 // pred_region
          %105 = vsyncadd [#allocation4], 0
          %s107 = sshll.u32 [#allocation5], 4
          %s108 = int_to_ptr.vmem [resolvable:$true] %s107
          %s109 = sshll.u32 %s1, 4
          %s110 = int_to_ptr.hbm [resolvable:$true] %s109
          %112 = dma.vmem_to_hbm [thread:$0]  %s108, 128, %s110, [#allocation4]
        $region32: #{tpu_custom_call.1} parent=23 // pred_fallthru
          _
        // Predicated region
        $region33: #{tpu_custom_call.1} parent=23 // pred_check
          %p113 = pneg %p48
        $region34: #{tpu_custom_call.1} parent=23 // pred_check_branch
          %115 = sbr.rel (%p113) target = $region36
        $region35: #{tpu_custom_call.1} parent=23 // pred_region
          %117 = dma.done [#allocation4], 128
        $region36: #{tpu_custom_call.1} parent=23 // pred_fallthru
          _
      $region24: #{tpu_custom_call.1} parent=5 // pred_fallthru
        _
      %p118 = scmp.le.s32.totalorder 2, %s9
      // Predicated region
      $region37: #{tpu_custom_call.1} parent=5 // pred_check
        %p119 = pneg %p118
      $region38: #{tpu_custom_call.1} parent=5 // pred_check_branch
        %121 = sbr.rel (%p119) target = $region40
      $region39: #{tpu_custom_call.1} parent=5 // pred_region
        %s122 = ssub.s32 %s9, 2
      $region40: #{tpu_custom_call.1} parent=5 // pred_fallthru
        _
    $region6: #{tpu_custom_call.1} parent=1 // loop_footer
      %s13 = sadd.s32 1, %s9
    $region7: #{tpu_custom_call.1} parent=1 // loop_footer_branch
      %8 = sbr.rel target = $region3
    $region8: #{tpu_custom_call.1} parent=1 // loop_exit
      _
    %123 = vsyncpa [#allocation3], 1
    %s124 = scalar_lea.sflag [#allocation3], 1
    %125 = vsyncpa %s124, 1
    %126 = vsyncpa [#allocation4], 1
    %s127 = scalar_lea.sflag [#allocation4], 1
    %128 = vsyncpa %s127, 1

// kernel: tpu_custom_call.1
$region0: #{tpu_custom_call.1}
  #allocation0 [shape = 'u32[]', space=smem, size = 0x4, offset = 0x4, fixed_abs, tag = 'smem constant byte address 0x4 - core index']
  #allocation1 [shape = 'u32[72,128]{1,0:T(1,128)}', space=vmem, size = 0x9000, scoped, tag = 'internal scratch']
  #allocation2 [shape = 'f32[16,32]{1,0:T(8,128)}', space=vmem, size = 0x2000, scoped, tag = 'scratch operand']
  %s0 = inlined_call_operand.vmem [shape: f32[16,32], index: 0, kind: input, shape index: {}]
  %s1 = inlined_call_operand.vmem [shape: f32[32,64], index: 1, kind: input, shape index: {}]
  %s2 = inlined_call_operand.vmem [shape: f32[1,64], index: 2, kind: input, shape index: {}]
  %s3 = inlined_call_operand.vmem [shape: f32[64,32], index: 3, kind: input, shape index: {}]
  %s4 = inlined_call_operand.vmem [shape: f32[1,32], index: 4, kind: input, shape index: {}]
  %s5 = inlined_call_operand.hbm [shape: f32[16,32], index: 5, kind: output, shape index: {}]
  %s6 = sld [smem:[#allocation0]]
  $region30: #{tpu_custom_call.1} parent=0
    _
  %s8 = ssub.s32 1, %s6
  %s9 = scalar_select 0, %s8, %s6
  $region1: #{tpu_custom_call.1} parent=0
    #allocation3 [shape = 'u8[8192]{0}', space=vmem, size = 0x2000, scoped, tag = 'output window, operand 0, single buffered']
    #allocation4 [shape = 's32[1]{0}', space=sflag, size = 0x4, scoped, tag = 'scoped memory for tpu_custom_call.1']
    %10 = vsyncpa [#allocation4], 0
    // Predicated region
    $region2: #{tpu_custom_call.1} parent=1 // pred_check
      _
    $region3: #{tpu_custom_call.1} parent=1 // pred_check_branch
      %12 = sbr.rel (0) target = $region5
    $region4: #{tpu_custom_call.1} parent=1 // pred_region
      _
    $region5: #{tpu_custom_call.1} parent=1 // pred_fallthru
      _
    // Predicated region
    $region6: #{tpu_custom_call.1} parent=1 // pred_check
      _
    $region7: #{tpu_custom_call.1} parent=1 // pred_check_branch
      %14 = sbr.rel (0) target = $region9
    $region8: #{tpu_custom_call.1} parent=1 // pred_region
      _
    $region9: #{tpu_custom_call.1} parent=1 // pred_fallthru
      _
    // Predicated region
    $region10: #{tpu_custom_call.1} parent=1 // pred_check
      _
    $region11: #{tpu_custom_call.1} parent=1 // pred_check_branch
      %16 = sbr.rel (0) target = $region13
    $region12: #{tpu_custom_call.1} parent=1 // pred_region
      _
    $region13: #{tpu_custom_call.1} parent=1 // pred_fallthru
      _
    // Predicated region
    $region14: #{tpu_custom_call.1} parent=1 // pred_check
      _
    $region15: #{tpu_custom_call.1} parent=1 // pred_check_branch
      %18 = sbr.rel (0) target = $region17
    $region16: #{tpu_custom_call.1} parent=1 // pred_region
      _
    $region17: #{tpu_custom_call.1} parent=1 // pred_fallthru
      _
    // Predicated region
    $region18: #{tpu_custom_call.1} parent=1 // pred_check
      _
    $region19: #{tpu_custom_call.1} parent=1 // pred_check_branch
      %20 = sbr.rel (0) target = $region21
    $region20: #{tpu_custom_call.1} parent=1 // pred_region
      _
    $region21: #{tpu_custom_call.1} parent=1 // pred_fallthru
      _
    %v21 = vld [vmem:[%s0] sm:$0xff]
    %v22 = vld [vmem:[%s0 + $0x8] sm:$0xff]
    %vm23 = vcmask 261120
    %24 = vst.msk [vmem:[#allocation2] sm:$0xff] %vm23, 0.0
    %25 = vst.msk [vmem:[#allocation2 + $0x8] sm:$0xff] %vm23, 0.0
    %v26 = vld [vmem:[%s1] sm:$0xff]
    %v27 = vld [vmem:[%s1 + $0x8] sm:$0xff]
    %v28 = vld [vmem:[%s1 + $0x10] sm:$0xff]
    %v29 = vld [vmem:[%s1 + $0x18] sm:$0xff]
    %v30 = vld [vmem:[%s2] sm:$0x1]
    %v32 = vperm.slane %v30, 0
    %v35 = vsel %vm23, %v21, 0
    %v38 = vsel %vm23, %v22, 0
    %40 = vmatpush.msra.mxu0 0.0
    %41 = vmatpush.msra.mxu0 0.0
    %42 = vmatpush.msra.mxu0 0.0
    %43 = vmatpush.msra.mxu0 0.0
    %44 = vmatpush.msra.mxu0 0.0
    %45 = vmatpush.msra.mxu0 0.0
    %46 = vmatpush.msra.mxu0 0.0
    %47 = vmatpush.msra.mxu0 0.0
    %48 = vmatpush.msra.mxu0 0.0
    %49 = vmatpush.msra.mxu0 0.0
    %50 = vmatpush.msra.mxu0 0.0
    %51 = vmatpush.msra.mxu0 0.0
    %v52 = vand.u32 %v29, 4294901760
    %53 = vmatpush.msra.mxu0 %v52
    %v54 = vand.u32 %v28, 4294901760
    %55 = vmatpush.msra.mxu0 %v54
    %v56 = vand.u32 %v27, 4294901760
    %57 = vmatpush.msra.mxu0 %v56
    %v58 = vand.u32 %v26, 4294901760
    %59 = vmatpush.msra.mxu0 %v58
    %v60 = vand.u32 %v35, 4294901760
    %v61 = vsub.f32 %v35, %v60
    %v62 = vand.u32 %v61, 4294901760
    %v63 = vsub.f32 %v61, %v62
    %v64 = vand.u32 %v63, 4294901760
    %65 = vmatmul.f32.gmra.mxu0 %v64
    %v66 = vpop.f32.mrf.mxu0
    %v67 = vadd.f32 %v32, %v66
    %v68 = vand.u32 %v38, 4294901760
    %v69 = vsub.f32 %v38, %v68
    %v70 = vand.u32 %v69, 4294901760
    %v71 = vsub.f32 %v69, %v70
    %v72 = vand.u32 %v71, 4294901760
    %73 = vmatmul.f32.gmra.mxu0 %v72
    %v74 = vpop.f32.mrf.mxu0
    %v75 = vadd.f32 %v32, %v74
    %76 = vdwg.mxu0
    %77 = vmatpush.msra.mxu0 0.0
    %78 = vmatpush.msra.mxu0 0.0
    %79 = vmatpush.msra.mxu0 0.0
    %80 = vmatpush.msra.mxu0 0.0
    %81 = vmatpush.msra.mxu0 0.0
    %82 = vmatpush.msra.mxu0 0.0
    %83 = vmatpush.msra.mxu0 0.0
    %84 = vmatpush.msra.mxu0 0.0
    %85 = vmatpush.msra.mxu0 0.0
    %86 = vmatpush.msra.mxu0 0.0
    %87 = vmatpush.msra.mxu0 0.0
    %88 = vmatpush.msra.mxu0 0.0
    %v89 = vand.u32 %v29, 4294901760
    %v90 = vsub.f32 %v29, %v89
    %v91 = vand.u32 %v90, 4294901760
    %v92 = vsub.f32 %v90, %v91
    %v93 = vand.u32 %v92, 4294901760
    %94 = vmatpush.msra.mxu0 %v93
    %v95 = vand.u32 %v28, 4294901760
    %v96 = vsub.f32 %v28, %v95
    %v97 = vand.u32 %v96, 4294901760
    %v98 = vsub.f32 %v96, %v97
    %v99 = vand.u32 %v98, 4294901760
    %100 = vmatpush.msra.mxu0 %v99
    %v101 = vand.u32 %v27, 4294901760
    %v102 = vsub.f32 %v27, %v101
    %v103 = vand.u32 %v102, 4294901760
    %v104 = vsub.f32 %v102, %v103
    %v105 = vand.u32 %v104, 4294901760
    %106 = vmatpush.msra.mxu0 %v105
    %v107 = vand.u32 %v26, 4294901760
    %v108 = vsub.f32 %v26, %v107
    %v109 = vand.u32 %v108, 4294901760
    %v110 = vsub.f32 %v108, %v109
    %v111 = vand.u32 %v110, 4294901760
    %112 = vmatpush.msra.mxu0 %v111
    %v113 = vand.u32 %v35, 4294901760
    %114 = vmatmul.f32.gmra.mxu0 %v113
    %v115 = vpop.f32.mrf.mxu0
    %v116 = vadd.f32 %v67, %v115
    %v117 = vand.u32 %v38, 4294901760
    %118 = vmatmul.f32.gmra.mxu0 %v117
    %v119 = vpop.f32.mrf.mxu0
    %v120 = vadd.f32 %v75, %v119
    %121 = vdwg.mxu0
    %122 = vmatpush.msra.mxu0 0.0
    %123 = vmatpush.msra.mxu0 0.0
    %124 = vmatpush.msra.mxu0 0.0
    %125 = vmatpush.msra.mxu0 0.0
    %126 = vmatpush.msra.mxu0 0.0
    %127 = vmatpush.msra.mxu0 0.0
    %128 = vmatpush.msra.mxu0 0.0
    %129 = vmatpush.msra.mxu0 0.0
    %130 = vmatpush.msra.mxu0 0.0
    %131 = vmatpush.msra.mxu0 0.0
    %132 = vmatpush.msra.mxu0 0.0
    %133 = vmatpush.msra.mxu0 0.0
    %v134 = vand.u32 %v29, 4294901760
    %v135 = vsub.f32 %v29, %v134
    %136 = vmatpush.msra.mxu0 %v135
    %v137 = vand.u32 %v28, 4294901760
    %v138 = vsub.f32 %v28, %v137
    %139 = vmatpush.msra.mxu0 %v138
    %v140 = vand.u32 %v27, 4294901760
    %v141 = vsub.f32 %v27, %v140
    %142 = vmatpush.msra.mxu0 %v141
    %v143 = vand.u32 %v26, 4294901760
    %v144 = vsub.f32 %v26, %v143
    %145 = vmatpush.msra.mxu0 %v144
    %v146 = vand.u32 %v35, 4294901760
    %v147 = vsub.f32 %v35, %v146
    %148 = vmatmul.f32.gmra.mxu0 %v147
    %v149 = vpop.f32.mrf.mxu0
    %v150 = vadd.f32 %v116, %v149
    %v151 = vand.u32 %v38, 4294901760
    %v152 = vsub.f32 %v38, %v151
    %153 = vmatmul.f32.gmra.mxu0 %v152
    %v154 = vpop.f32.mrf.mxu0
    %v155 = vadd.f32 %v120, %v154
    %156 = vdwg.mxu0
    %157 = vmatpush.msra.mxu0 0.0
    %158 = vmatpush.msra.mxu0 0.0
    %159 = vmatpush.msra.mxu0 0.0
    %160 = vmatpush.msra.mxu0 0.0
    %161 = vmatpush.msra.mxu0 0.0
    %162 = vmatpush.msra.mxu0 0.0
    %163 = vmatpush.msra.mxu0 0.0
    %164 = vmatpush.msra.mxu0 0.0
    %165 = vmatpush.msra.mxu0 0.0
    %166 = vmatpush.msra.mxu0 0.0
    %167 = vmatpush.msra.mxu0 0.0
    %168 = vmatpush.msra.mxu0 0.0
    %v169 = vand.u32 %v29, 4294901760
    %170 = vmatpush.msra.mxu0 %v169
    %v171 = vand.u32 %v28, 4294901760
    %172 = vmatpush.msra.mxu0 %v171
    %v173 = vand.u32 %v27, 4294901760
    %174 = vmatpush.msra.mxu0 %v173
    %v175 = vand.u32 %v26, 4294901760
    %176 = vmatpush.msra.mxu0 %v175
    %v177 = vand.u32 %v35, 4294901760
    %v178 = vsub.f32 %v35, %v177
    %v179 = vand.u32 %v178, 4294901760
    %180 = vmatmul.f32.gmra.mxu0 %v179
    %v181 = vpop.f32.mrf.mxu0
    %v182 = vadd.f32 %v150, %v181
    %v183 = vand.u32 %v38, 4294901760
    %v184 = vsub.f32 %v38, %v183
    %v185 = vand.u32 %v184, 4294901760
    %186 = vmatmul.f32.gmra.mxu0 %v185
    %v187 = vpop.f32.mrf.mxu0
    %v188 = vadd.f32 %v155, %v187
    %189 = vdwg.mxu0
    %190 = vmatpush.msra.mxu0 0.0
    %191 = vmatpush.msra.mxu0 0.0
    %192 = vmatpush.msra.mxu0 0.0
    %193 = vmatpush.msra.mxu0 0.0
    %194 = vmatpush.msra.mxu0 0.0
    %195 = vmatpush.msra.mxu0 0.0
    %196 = vmatpush.msra.mxu0 0.0
    %197 = vmatpush.msra.mxu0 0.0
    %198 = vmatpush.msra.mxu0 0.0
    %199 = vmatpush.msra.mxu0 0.0
    %200 = vmatpush.msra.mxu0 0.0
    %201 = vmatpush.msra.mxu0 0.0
    %v202 = vand.u32 %v29, 4294901760
    %v203 = vsub.f32 %v29, %v202
    %v204 = vand.u32 %v203, 4294901760
    %205 = vmatpush.msra.mxu0 %v204
    %v206 = vand.u32 %v28, 4294901760
    %v207 = vsub.f32 %v28, %v206
    %v208 = vand.u32 %v207, 4294901760
    %209 = vmatpush.msra.mxu0 %v208
    %v210 = vand.u32 %v27, 4294901760
    %v211 = vsub.f32 %v27, %v210
    %v212 = vand.u32 %v211, 4294901760
    %213 = vmatpush.msra.mxu0 %v212
    %v214 = vand.u32 %v26, 4294901760
    %v215 = vsub.f32 %v26, %v214
    %v216 = vand.u32 %v215, 4294901760
    %217 = vmatpush.msra.mxu0 %v216
    %v218 = vand.u32 %v35, 4294901760
    %219 = vmatmul.f32.gmra.mxu0 %v218
    %v220 = vpop.f32.mrf.mxu0
    %v221 = vadd.f32 %v182, %v220
    %v222 = vand.u32 %v38, 4294901760
    %223 = vmatmul.f32.gmra.mxu0 %v222
    %v224 = vpop.f32.mrf.mxu0
    %v225 = vadd.f32 %v188, %v224
    %226 = vdwg.mxu0
    %227 = vmatpush.msra.mxu0 0.0
    %228 = vmatpush.msra.mxu0 0.0
    %229 = vmatpush.msra.mxu0 0.0
    %230 = vmatpush.msra.mxu0 0.0
    %231 = vmatpush.msra.mxu0 0.0
    %232 = vmatpush.msra.mxu0 0.0
    %233 = vmatpush.msra.mxu0 0.0
    %234 = vmatpush.msra.mxu0 0.0
    %235 = vmatpush.msra.mxu0 0.0
    %236 = vmatpush.msra.mxu0 0.0
    %237 = vmatpush.msra.mxu0 0.0
    %238 = vmatpush.msra.mxu0 0.0
    %v239 = vand.u32 %v29, 4294901760
    %240 = vmatpush.msra.mxu0 %v239
    %v241 = vand.u32 %v28, 4294901760
    %242 = vmatpush.msra.mxu0 %v241
    %v243 = vand.u32 %v27, 4294901760
    %244 = vmatpush.msra.mxu0 %v243
    %v245 = vand.u32 %v26, 4294901760
    %246 = vmatpush.msra.mxu0 %v245
    %v247 = vand.u32 %v35, 4294901760
    %248 = vmatmul.f32.gmra.mxu0 %v247
    %v249 = vpop.f32.mrf.mxu0
    %v250 = vadd.f32 %v221, %v249
    %v251 = vand.u32 %v38, 4294901760
    %252 = vmatmul.f32.gmra.mxu0 %v251
    %v253 = vpop.f32.mrf.mxu0
    %v254 = vadd.f32 %v225, %v253
    %255 = vdwg.mxu0
    %v256 = vmul.f32 %v250, 0.5
    %v257 = vmul.f32 %v254, 0.5
    %v258 = vmul.f32 %v250, 0.70710677
    %v259 = vmul.f32 %v254, 0.70710677
    %v260 = vmul.f32 %v258, %v258
    %v261 = vmin.f32 16.0, %v260
    %v262 = vmul.f32 %v261, 2.1237322e-06
    %v263 = vadd.f32 %v262, 0.00028619796
    %v264 = vmul.f32 %v261, %v263
    %v265 = vadd.f32 %v264, 0.0036580483
    %v266 = vmul.f32 %v261, %v265
    %v267 = vadd.f32 %v266, 0.05243302
    %v268 = vmul.f32 %v261, %v267
    %v269 = vadd.f32 %v268, 0.18741608
    %v270 = vmul.f32 %v261, %v269
    %v271 = vadd.f32 %v270, 1.1283791
    %v272 = vmul.f32 %v258, %v271
    %v273 = vmul.f32 %v261, 3.8918573e-05
    %v274 = vadd.f32 %v273, 0.001143296
    %v275 = vmul.f32 %v261, %v274
    %v276 = vadd.f32 %v275, 0.014752088
    %v277 = vmul.f32 %v261, %v276
    %v278 = vadd.f32 %v277, 0.112945676
    %v279 = vmul.f32 %v261, %v278
    %v280 = vadd.f32 %v279, 0.4994258
    %v281 = vmul.f32 %v261, %v280
    %v282 = vadd.f32 %v281, 1.0
    %v283 = vrcp.pop %v282
    %v284 = vmul.f32 %v282, %v283
    %v285 = vsub.f32 1.0, %v284
    %v286 = vmul.f32 %v283, %v285
    %v287 = vadd.f32 %v283, %v286
    %vm288 = vweird.f32 %v282
    %vm289 = vweird.f32 %v283
    %vm290 = vmor %vm288, %vm289
    %v291 = vsel %vm290, %v283, %v287
    %v292 = vand.u32 2147483647, %v282
    %vm293 = vcmp.eq.f32.partialorder %v292, 8.507059e+37
    %v294 = vand.u32 %v282, 2147483648
    %v295 = vor.u32 1.1754944e-38, %v294
    %v296 = vsel %vm293, %v295, %v291
    %v297 = vmul.f32 %v272, %v296
    %v298 = vmin.f32 %v297, 1.0
    %v299 = vmax.f32 %v298, -1.0
    %v300 = vmul.f32 %v259, %v259
    %v301 = vmin.f32 16.0, %v300
    %v302 = vmul.f32 %v301, 2.1237322e-06
    %v303 = vadd.f32 %v302, 0.00028619796
    %v304 = vmul.f32 %v301, %v303
    %v305 = vadd.f32 %v304, 0.0036580483
    %v306 = vmul.f32 %v301, %v305
    %v307 = vadd.f32 %v306, 0.05243302
    %v308 = vmul.f32 %v301, %v307
    %v309 = vadd.f32 %v308, 0.18741608
    %v310 = vmul.f32 %v301, %v309
    %v311 = vadd.f32 %v310, 1.1283791
    %v312 = vmul.f32 %v259, %v311
    %v313 = vmul.f32 %v301, 3.8918573e-05
    %v314 = vadd.f32 %v313, 0.001143296
    %v315 = vmul.f32 %v301, %v314
    %v316 = vadd.f32 %v315, 0.014752088
    %v317 = vmul.f32 %v301, %v316
    %v318 = vadd.f32 %v317, 0.112945676
    %v319 = vmul.f32 %v301, %v318
    %v320 = vadd.f32 %v319, 0.4994258
    %v321 = vmul.f32 %v301, %v320
    %v322 = vadd.f32 %v321, 1.0
    %v323 = vrcp.pop %v322
    %v324 = vmul.f32 %v322, %v323
    %v325 = vsub.f32 1.0, %v324
    %v326 = vmul.f32 %v323, %v325
    %v327 = vadd.f32 %v323, %v326
    %vm328 = vweird.f32 %v322
    %vm329 = vweird.f32 %v323
    %vm330 = vmor %vm328, %vm329
    %v331 = vsel %vm330, %v323, %v327
    %v332 = vand.u32 2147483647, %v322
    %vm333 = vcmp.eq.f32.partialorder %v332, 8.507059e+37
    %v334 = vand.u32 %v322, 2147483648
    %v335 = vor.u32 1.1754944e-38, %v334
    %v336 = vsel %vm333, %v335, %v331
    %v337 = vmul.f32 %v312, %v336
    %v338 = vmin.f32 %v337, 1.0
    %v339 = vmax.f32 %v338, -1.0
    %v340 = vadd.f32 %v299, 1.0
    %v341 = vadd.f32 %v339, 1.0
    %v342 = vmul.f32 %v256, %v340
    %v343 = vmul.f32 %v257, %v341
    %v344 = vld [vmem:[#allocation2] sm:$0xff]
    %v345 = vld [vmem:[#allocation2 + $0x8] sm:$0xff]
    %v346 = vld [vmem:[%s3] sm:$0xff]
    %v347 = vld [vmem:[%s3 + $0x8] sm:$0xff]
    %v348 = vld [vmem:[%s3 + $0x10] sm:$0xff]
    %v349 = vld [vmem:[%s3 + $0x18] sm:$0xff]
    %v350 = vld [vmem:[%s3 + $0x20] sm:$0xff]
    %v351 = vld [vmem:[%s3 + $0x28] sm:$0xff]
    %v352 = vld [vmem:[%s3 + $0x30] sm:$0xff]
    %v353 = vld [vmem:[%s3 + $0x38] sm:$0xff]
    %vm354 = vcmask 523264
    %v356 = vsel %vm354, %v342, 0
    %v359 = vsel %vm354, %v343, 0
    %361 = vmatpush.msra.mxu0 0.0
    %362 = vmatpush.msra.mxu0 0.0
    %363 = vmatpush.msra.mxu0 0.0
    %364 = vmatpush.msra.mxu0 0.0
    %365 = vmatpush.msra.mxu0 0.0
    %366 = vmatpush.msra.mxu0 0.0
    %367 = vmatpush.msra.mxu0 0.0
    %368 = vmatpush.msra.mxu0 0.0
    %v369 = vand.u32 %v353, 4294901760
    %370 = vmatpush.msra.mxu0 %v369
    %v371 = vand.u32 %v352, 4294901760
    %372 = vmatpush.msra.mxu0 %v371
    %v373 = vand.u32 %v351, 4294901760
    %374 = vmatpush.msra.mxu0 %v373
    %v375 = vand.u32 %v350, 4294901760
    %376 = vmatpush.msra.mxu0 %v375
    %v377 = vand.u32 %v349, 4294901760
    %378 = vmatpush.msra.mxu0 %v377
    %v379 = vand.u32 %v348, 4294901760
    %380 = vmatpush.msra.mxu0 %v379
    %v381 = vand.u32 %v347, 4294901760
    %382 = vmatpush.msra.mxu0 %v381
    %v383 = vand.u32 %v346, 4294901760
    %384 = vmatpush.msra.mxu0 %v383
    %v385 = vand.u32 %v356, 4294901760
    %v386 = vsub.f32 %v356, %v385
    %v387 = vand.u32 %v386, 4294901760
    %v388 = vsub.f32 %v386, %v387
    %v389 = vand.u32 %v388, 4294901760
    %390 = vmatmul.f32.gmra.mxu0 %v389
    %v391 = vpop.f32.mrf.mxu0
    %v392 = vadd.f32 0.0, %v391
    %v393 = vand.u32 %v359, 4294901760
    %v394 = vsub.f32 %v359, %v393
    %v395 = vand.u32 %v394, 4294901760
    %v396 = vsub.f32 %v394, %v395
    %v397 = vand.u32 %v396, 4294901760
    %398 = vmatmul.f32.gmra.mxu0 %v397
    %v399 = vpop.f32.mrf.mxu0
    %v400 = vadd.f32 0.0, %v399
    %401 = vdwg.mxu0
    %402 = vmatpush.msra.mxu0 0.0
    %403 = vmatpush.msra.mxu0 0.0
    %404 = vmatpush.msra.mxu0 0.0
    %405 = vmatpush.msra.mxu0 0.0
    %406 = vmatpush.msra.mxu0 0.0
    %407 = vmatpush.msra.mxu0 0.0
    %408 = vmatpush.msra.mxu0 0.0
    %409 = vmatpush.msra.mxu0 0.0
    %v410 = vand.u32 %v353, 4294901760
    %v411 = vsub.f32 %v353, %v410
    %v412 = vand.u32 %v411, 4294901760
    %v413 = vsub.f32 %v411, %v412
    %v414 = vand.u32 %v413, 4294901760
    %415 = vmatpush.msra.mxu0 %v414
    %v416 = vand.u32 %v352, 4294901760
    %v417 = vsub.f32 %v352, %v416
    %v418 = vand.u32 %v417, 4294901760
    %v419 = vsub.f32 %v417, %v418
    %v420 = vand.u32 %v419, 4294901760
    %421 = vmatpush.msra.mxu0 %v420
    %v422 = vand.u32 %v351, 4294901760
    %v423 = vsub.f32 %v351, %v422
    %v424 = vand.u32 %v423, 4294901760
    %v425 = vsub.f32 %v423, %v424
    %v426 = vand.u32 %v425, 4294901760
    %427 = vmatpush.msra.mxu0 %v426
    %v428 = vand.u32 %v350, 4294901760
    %v429 = vsub.f32 %v350, %v428
    %v430 = vand.u32 %v429, 4294901760
    %v431 = vsub.f32 %v429, %v430
    %v432 = vand.u32 %v431, 4294901760
    %433 = vmatpush.msra.mxu0 %v432
    %v434 = vand.u32 %v349, 4294901760
    %v435 = vsub.f32 %v349, %v434
    %v436 = vand.u32 %v435, 4294901760
    %v437 = vsub.f32 %v435, %v436
    %v438 = vand.u32 %v437, 4294901760
    %439 = vmatpush.msra.mxu0 %v438
    %v440 = vand.u32 %v348, 4294901760
    %v441 = vsub.f32 %v348, %v440
    %v442 = vand.u32 %v441, 4294901760
    %v443 = vsub.f32 %v441, %v442
    %v444 = vand.u32 %v443, 4294901760
    %445 = vmatpush.msra.mxu0 %v444
    %v446 = vand.u32 %v347, 4294901760
    %v447 = vsub.f32 %v347, %v446
    %v448 = vand.u32 %v447, 4294901760
    %v449 = vsub.f32 %v447, %v448
    %v450 = vand.u32 %v449, 4294901760
    %451 = vmatpush.msra.mxu0 %v450
    %v452 = vand.u32 %v346, 4294901760
    %v453 = vsub.f32 %v346, %v452
    %v454 = vand.u32 %v453, 4294901760
    %v455 = vsub.f32 %v453, %v454
    %v456 = vand.u32 %v455, 4294901760
    %457 = vmatpush.msra.mxu0 %v456
    %v458 = vand.u32 %v356, 4294901760
    %459 = vmatmul.f32.gmra.mxu0 %v458
    %v460 = vpop.f32.mrf.mxu0
    %v461 = vadd.f32 %v392, %v460
    %v462 = vand.u32 %v359, 4294901760
    %463 = vmatmul.f32.gmra.mxu0 %v462
    %v464 = vpop.f32.mrf.mxu0
    %v465 = vadd.f32 %v400, %v464
    %466 = vdwg.mxu0
    %467 = vmatpush.msra.mxu0 0.0
    %468 = vmatpush.msra.mxu0 0.0
    %469 = vmatpush.msra.mxu0 0.0
    %470 = vmatpush.msra.mxu0 0.0
    %471 = vmatpush.msra.mxu0 0.0
    %472 = vmatpush.msra.mxu0 0.0
    %473 = vmatpush.msra.mxu0 0.0
    %474 = vmatpush.msra.mxu0 0.0
    %v475 = vand.u32 %v353, 4294901760
    %v476 = vsub.f32 %v353, %v475
    %477 = vmatpush.msra.mxu0 %v476
    %v478 = vand.u32 %v352, 4294901760
    %v479 = vsub.f32 %v352, %v478
    %480 = vmatpush.msra.mxu0 %v479
    %v481 = vand.u32 %v351, 4294901760
    %v482 = vsub.f32 %v351, %v481
    %483 = vmatpush.msra.mxu0 %v482
    %v484 = vand.u32 %v350, 4294901760
    %v485 = vsub.f32 %v350, %v484
    %486 = vmatpush.msra.mxu0 %v485
    %v487 = vand.u32 %v349, 4294901760
    %v488 = vsub.f32 %v349, %v487
    %489 = vmatpush.msra.mxu0 %v488
    %v490 = vand.u32 %v348, 4294901760
    %v491 = vsub.f32 %v348, %v490
    %492 = vmatpush.msra.mxu0 %v491
    %v493 = vand.u32 %v347, 4294901760
    %v494 = vsub.f32 %v347, %v493
    %495 = vmatpush.msra.mxu0 %v494
    %v496 = vand.u32 %v346, 4294901760
    %v497 = vsub.f32 %v346, %v496
    %498 = vmatpush.msra.mxu0 %v497
    %v499 = vand.u32 %v356, 4294901760
    %v500 = vsub.f32 %v356, %v499
    %501 = vmatmul.f32.gmra.mxu0 %v500
    %v502 = vpop.f32.mrf.mxu0
    %v503 = vadd.f32 %v461, %v502
    %v504 = vand.u32 %v359, 4294901760
    %v505 = vsub.f32 %v359, %v504
    %506 = vmatmul.f32.gmra.mxu0 %v505
    %v507 = vpop.f32.mrf.mxu0
    %v508 = vadd.f32 %v465, %v507
    %509 = vdwg.mxu0
    %510 = vmatpush.msra.mxu0 0.0
    %511 = vmatpush.msra.mxu0 0.0
    %512 = vmatpush.msra.mxu0 0.0
    %513 = vmatpush.msra.mxu0 0.0
    %514 = vmatpush.msra.mxu0 0.0
    %515 = vmatpush.msra.mxu0 0.0
    %516 = vmatpush.msra.mxu0 0.0
    %517 = vmatpush.msra.mxu0 0.0
    %v518 = vand.u32 %v353, 4294901760
    %519 = vmatpush.msra.mxu0 %v518
    %v520 = vand.u32 %v352, 4294901760
    %521 = vmatpush.msra.mxu0 %v520
    %v522 = vand.u32 %v351, 4294901760
    %523 = vmatpush.msra.mxu0 %v522
    %v524 = vand.u32 %v350, 4294901760
    %525 = vmatpush.msra.mxu0 %v524
    %v526 = vand.u32 %v349, 4294901760
    %527 = vmatpush.msra.mxu0 %v526
    %v528 = vand.u32 %v348, 4294901760
    %529 = vmatpush.msra.mxu0 %v528
    %v530 = vand.u32 %v347, 4294901760
    %531 = vmatpush.msra.mxu0 %v530
    %v532 = vand.u32 %v346, 4294901760
    %533 = vmatpush.msra.mxu0 %v532
    %v534 = vand.u32 %v356, 4294901760
    %v535 = vsub.f32 %v356, %v534
    %v536 = vand.u32 %v535, 4294901760
    %537 = vmatmul.f32.gmra.mxu0 %v536
    %v538 = vpop.f32.mrf.mxu0
    %v539 = vadd.f32 %v503, %v538
    %v540 = vand.u32 %v359, 4294901760
    %v541 = vsub.f32 %v359, %v540
    %v542 = vand.u32 %v541, 4294901760
    %543 = vmatmul.f32.gmra.mxu0 %v542
    %v544 = vpop.f32.mrf.mxu0
    %v545 = vadd.f32 %v508, %v544
    %546 = vdwg.mxu0
    %547 = vmatpush.msra.mxu0 0.0
    %548 = vmatpush.msra.mxu0 0.0
    %549 = vmatpush.msra.mxu0 0.0
    %550 = vmatpush.msra.mxu0 0.0
    %551 = vmatpush.msra.mxu0 0.0
    %552 = vmatpush.msra.mxu0 0.0
    %553 = vmatpush.msra.mxu0 0.0
    %554 = vmatpush.msra.mxu0 0.0
    %v555 = vand.u32 %v353, 4294901760
    %v556 = vsub.f32 %v353, %v555
    %v557 = vand.u32 %v556, 4294901760
    %558 = vmatpush.msra.mxu0 %v557
    %v559 = vand.u32 %v352, 4294901760
    %v560 = vsub.f32 %v352, %v559
    %v561 = vand.u32 %v560, 4294901760
    %562 = vmatpush.msra.mxu0 %v561
    %v563 = vand.u32 %v351, 4294901760
    %v564 = vsub.f32 %v351, %v563
    %v565 = vand.u32 %v564, 4294901760
    %566 = vmatpush.msra.mxu0 %v565
    %v567 = vand.u32 %v350, 4294901760
    %v568 = vsub.f32 %v350, %v567
    %v569 = vand.u32 %v568, 4294901760
    %570 = vmatpush.msra.mxu0 %v569
    %v571 = vand.u32 %v349, 4294901760
    %v572 = vsub.f32 %v349, %v571
    %v573 = vand.u32 %v572, 4294901760
    %574 = vmatpush.msra.mxu0 %v573
    %v575 = vand.u32 %v348, 4294901760
    %v576 = vsub.f32 %v348, %v575
    %v577 = vand.u32 %v576, 4294901760
    %578 = vmatpush.msra.mxu0 %v577
    %v579 = vand.u32 %v347, 4294901760
    %v580 = vsub.f32 %v347, %v579
    %v581 = vand.u32 %v580, 4294901760
    %582 = vmatpush.msra.mxu0 %v581
    %v583 = vand.u32 %v346, 4294901760
    %v584 = vsub.f32 %v346, %v583
    %v585 = vand.u32 %v584, 4294901760
    %586 = vmatpush.msra.mxu0 %v585
    %v587 = vand.u32 %v356, 4294901760
    %588 = vmatmul.f32.gmra.mxu0 %v587
    %v589 = vpop.f32.mrf.mxu0
    %v590 = vadd.f32 %v539, %v589
    %v591 = vand.u32 %v359, 4294901760
    %592 = vmatmul.f32.gmra.mxu0 %v591
    %v593 = vpop.f32.mrf.mxu0
    %v594 = vadd.f32 %v545, %v593
    %595 = vdwg.mxu0
    %596 = vmatpush.msra.mxu0 0.0
    %597 = vmatpush.msra.mxu0 0.0
    %598 = vmatpush.msra.mxu0 0.0
    %599 = vmatpush.msra.mxu0 0.0
    %600 = vmatpush.msra.mxu0 0.0
    %601 = vmatpush.msra.mxu0 0.0
    %602 = vmatpush.msra.mxu0 0.0
    %603 = vmatpush.msra.mxu0 0.0
    %v604 = vand.u32 %v353, 4294901760
    %605 = vmatpush.msra.mxu0 %v604
    %v606 = vand.u32 %v352, 4294901760
    %607 = vmatpush.msra.mxu0 %v606
    %v608 = vand.u32 %v351, 4294901760
    %609 = vmatpush.msra.mxu0 %v608
    %v610 = vand.u32 %v350, 4294901760
    %611 = vmatpush.msra.mxu0 %v610
    %v612 = vand.u32 %v349, 4294901760
    %613 = vmatpush.msra.mxu0 %v612
    %v614 = vand.u32 %v348, 4294901760
    %615 = vmatpush.msra.mxu0 %v614
    %v616 = vand.u32 %v347, 4294901760
    %617 = vmatpush.msra.mxu0 %v616
    %v618 = vand.u32 %v346, 4294901760
    %619 = vmatpush.msra.mxu0 %v618
    %v620 = vand.u32 %v356, 4294901760
    %621 = vmatmul.f32.gmra.mxu0 %v620
    %v622 = vpop.f32.mrf.mxu0
    %v623 = vadd.f32 %v590, %v622
    %v624 = vand.u32 %v359, 4294901760
    %625 = vmatmul.f32.gmra.mxu0 %v624
    %v626 = vpop.f32.mrf.mxu0
    %v627 = vadd.f32 %v594, %v626
    %628 = vdwg.mxu0
    %v629 = vadd.f32 %v344, %v623
    %v630 = vadd.f32 %v345, %v627
    %631 = vst.msk [vmem:[#allocation2] sm:$0xff] %vm23, %v629
    %632 = vst.msk [vmem:[#allocation2 + $0x8] sm:$0xff] %vm23, %v630
    %v633 = vld [vmem:[#allocation2] sm:$0xff]
    %v634 = vld [vmem:[#allocation2 + $0x8] sm:$0xff]
    %v635 = vld [vmem:[%s4] sm:$0x1]
    %v637 = vperm.slane %v635, 0
    %v639 = vadd.f32 %v633, %v637
    %v640 = vadd.f32 %v634, %v637
    %641 = vst.msk [vmem:[#allocation3] sm:$0xff] %vm23, %v639
    %642 = vst.msk [vmem:[#allocation3 + $0x8] sm:$0xff] %vm23, %v640
    // Predicated region
    $region22: #{tpu_custom_call.1} parent=1 // pred_check
      _
    $region23: #{tpu_custom_call.1} parent=1 // pred_check_branch
      %644 = sbr.rel (0) target = $region25
    $region24: #{tpu_custom_call.1} parent=1 // pred_region
      %646 = vsyncadd [#allocation4], 0
      %s647 = sshll.u32 [#allocation3], 4
      %s648 = int_to_ptr.vmem [resolvable:$true] %s647
      %s649 = sshll.u32 %s5, 4
      %s650 = int_to_ptr.hbm [resolvable:$true] %s649
      %655 = dma.vmem_to_hbm [thread:$0]  %s648, 256, %s650, [#allocation4], 128, 128, 8
    $region25: #{tpu_custom_call.1} parent=1 // pred_fallthru
      _
    // Predicated region
    $region26: #{tpu_custom_call.1} parent=1 // pred_check
      _
    $region27: #{tpu_custom_call.1} parent=1 // pred_check_branch
      %657 = sbr.rel (0) target = $region29
    $region28: #{tpu_custom_call.1} parent=1 // pred_region
      %659 = dma.done [#allocation4], 256
    $region29: #{tpu_custom_call.1} parent=1 // pred_fallthru
      _
    %660 = vsyncpa [#allocation4], 1

</llo_original>
